<compile_context>
chip_gen: v7x
topology: tpu7x:2x2x1
jax: 0.10.0
libtpu: 0.0.40
codegen_flags: <defaults>
</compile_context>

<pallas_src>
import math
import functools

import numpy as np
import jax
import jax.numpy as jnp
from jax.experimental import pallas as pl
from jax.experimental.pallas import tpu as pltpu


# ----------------------------------------------------------------------------
# Parameter construction (deterministic, mirrors RegLoss.__init__)
# ----------------------------------------------------------------------------
def make_weight_map(width: int, height: int) -> jnp.ndarray:
    w = np.zeros((width, height), dtype=np.float32)
    for i in range(24):
        w[i:width - i, i:height - i] += 1.0   # empty slices are no-ops (as in torch)
    flat = w.reshape(-1)
    flat = flat - flat.max()
    sm = np.exp(flat)
    sm = sm / sm.sum()                         # softmax over flattened map
    return jnp.asarray(sm.reshape(width, height), dtype=jnp.float32)


TIME_WEIGHTS = {
    "default": (1.0, 1.0, 1.0, 1.0),
    "30": (1.0, 0.5, 0.3, 0.2),
    "60": (0.5, 1.0, 0.5, 0.3),
    "90": (0.3, 0.5, 1.0, 0.5),
    "120": (0.2, 0.3, 0.5, 1.0),
}
BALANCING_WEIGHTS = (1.0, 2.0, 5.0, 10.0, 40.0)
MSE_WEIGHT = 0.4
MAE_WEIGHT = 0.6
NUM_CHANNELS = 4

_VMEM_BUDGET_BYTES = 56 << 20   # conservative: within v7x's 64 MiB physical VMEM


# ----------------------------------------------------------------------------
# Stage 1 kernel: per-(batch, channel) weighted MSE / MAE spatial sums
# ----------------------------------------------------------------------------
def _channel_sums_kernel(out_ref, lab_ref, wmap_ref, sums_ref, *,
                         balancing_weights, batch_block):
    # out_ref/lab_ref: (batch_block, 4, W, H); wmap_ref: (W, H) f32 (resident)
    # sums_ref: (batch_block, 1, 8) -> [mse_0..3, mae_0..3] per local batch row
    wmap = wmap_ref[...]

    bw = balancing_weights
    thrs = [(bw[k] + 10.0) / 85.0 for k in range(len(bw) - 1)]   # self._norm
    deltas = [bw[k + 1] - bw[k] for k in range(len(bw) - 1)]

    for b in range(batch_block):                 # static unroll (small)
        mse_parts = []
        mae_parts = []
        for i in range(NUM_CHANNELS):            # static unroll: fused per channel
            o = out_ref[b, i].astype(jnp.float32)     # (W, H)
            l = lab_ref[b, i].astype(jnp.float32)     # (W, H)
            ae = jnp.abs(o - l)                       # |diff| (L1, reduction='none')

            if i == 0:
                # channel 0 uses the weight map only -- skip balancing weights
                cw = wmap
            else:
                wt = jnp.ones_like(l)                 # balancing_weights[0] == 1
                for thr, d in zip(thrs, deltas):
                    # cmp + select + add (cheaper than cmp+convert+mul+add)
                    wt = wt + jnp.where(l >= thr, jnp.float32(d), jnp.float32(0.0))
                cw = wmap * wt

            wae = cw * ae                             # weighted abs error
            wse = wae * ae                            # == cw * diff^2 (reuse wae)
            mse_parts.append(jnp.sum(wse, keepdims=True))   # (1, 1)
            mae_parts.append(jnp.sum(wae, keepdims=True))   # (1, 1)

        # Single store per batch element instead of 8 masked single-lane stores.
        row = jnp.concatenate(mse_parts + mae_parts, axis=1)   # (1, 8)
        sums_ref[b, :, :] = row


# ----------------------------------------------------------------------------
# Finalize (plain jnp on (B, 1, 8) sums): batch mean u, sigma gating,
# time weights, uncertainty precision term and the final mean.
# ----------------------------------------------------------------------------
def _finalize(sums, log_var, time_weights, batch):
    s = sums.reshape(batch, 2 * NUM_CHANNELS)                   # (B, 8)
    mse = s[:, :NUM_CHANNELS]                                   # (B, 4)
    mae = s[:, NUM_CHANNELS:]                                   # (B, 4)

    comb = MSE_WEIGHT * mse + MAE_WEIGHT * mae                  # (B, 4)
    u = jnp.mean(comb, axis=0, keepdims=True)                   # (1, 4)
    # sigma = (sgn(v) + sgn(|v|)) / 2 == 1.0 where v > 0 else 0.0 (strict >)
    sigma = ((mse + mae - u) > 0.0).astype(jnp.float32)         # (B, 4)

    tw = jnp.asarray(time_weights, jnp.float32)                 # (4,)
    loss_reg = jnp.sum(tw[None, :] * sigma * comb, axis=1)      # (B,)

    lv = log_var.reshape(())
    precision = jnp.exp(-lv)
    # torch: sum over last dim (size 1) then mean over batch
    return jnp.mean(precision * loss_reg + jnp.abs(lv))


# ----------------------------------------------------------------------------
# Wrapper helpers
# ----------------------------------------------------------------------------
def _vmem_need_bytes(batch_block, W, H, in_itemsize):
    h_pad = -(-H // 128) * 128            # lane padding
    w_pad = -(-W // 8) * 8                # sublane padding (f32 tiling estimate)
    block_bytes = batch_block * NUM_CHANNELS * w_pad * h_pad * in_itemsize
    wmap_bytes = w_pad * h_pad * 4
    # 2 inputs, each double-buffered; weight_map (constant block) + slack.
    return 2 * 2 * block_bytes + 2 * wmap_bytes + (1 << 20)


def _pick_batch_block(B, requested, W, H, in_itemsize):
    bb = max(1, min(int(requested), B))
    while B % bb:
        bb -= 1
    # Keep >= 2 grid steps so the 'parallel' batch axis can still shard across
    # v7x's two TensorCores (no-op on v5e/v6e single-core chips).
    while bb > 1 and (B // bb) < 2:
        bb -= 1
        while B % bb:
            bb -= 1
    # Shrink until double-buffered blocks fit the VMEM budget.
    while bb > 1 and _vmem_need_bytes(bb, W, H, in_itemsize) > _VMEM_BUDGET_BYTES:
        bb -= 1
        while B % bb:
            bb -= 1
    return bb


# ----------------------------------------------------------------------------
# Wrapper
# ----------------------------------------------------------------------------
def reg_loss_pallas(output_reg, label_reg, weight_map, log_var,
                    focus_time="default", batch_block=None):
    """output_reg/label_reg: (B, 4, W, H) float (f32 or bf16 -- bf16 halves HBM
    bytes on the bandwidth-bound stage 1); weight_map: (W, H) f32;
    log_var: (1, 1) f32.  Returns scalar f32 loss.

    batch_block: batch elements per grid step. Default 4 (fits the 32 MiB
    default scoped VMEM on v6e/v7x at 280x384 f32; bf16 allows 8). It is
    auto-clamped to a divisor of B, kept so the grid has >= 2 steps, and
    shrunk if the double-buffered blocks would exceed ~56 MiB."""
    B, C, W, H = output_reg.shape
    assert C == NUM_CHANNELS

    in_itemsize = jnp.dtype(output_reg.dtype).itemsize
    if batch_block is None:
        batch_block = 4
    batch_block = _pick_batch_block(B, batch_block, W, H, in_itemsize)
    grid = (B // batch_block,)

    vmem_need = _vmem_need_bytes(batch_block, W, H, in_itemsize)
    vmem_limit = int(min(max(vmem_need, 32 << 20), 60 << 20))

    # Advisory cost hint: memory-bound custom call (2 full input reads),
    # ~25 VALU ops per element per channel, no transcendentals.
    elems = B * NUM_CHANNELS * W * H
    cost = pl.CostEstimate(
        flops=25 * elems,
        transcendentals=0,
        bytes_accessed=2 * elems * in_itemsize + W * H * 4
        + B * 2 * NUM_CHANNELS * 4,
    )

    # Stage 1: tiled, batch-parallel per-(b, c) weighted mse/mae sums.
    sums = pl.pallas_call(
        functools.partial(_channel_sums_kernel,
                          balancing_weights=BALANCING_WEIGHTS,
                          batch_block=batch_block),
        out_shape=jax.ShapeDtypeStruct((B, 1, 2 * NUM_CHANNELS), jnp.float32),
        grid=grid,
        in_specs=[
            pl.BlockSpec((batch_block, NUM_CHANNELS, W, H),
                         lambda b: (b, 0, 0, 0)),
            pl.BlockSpec((batch_block, NUM_CHANNELS, W, H),
                         lambda b: (b, 0, 0, 0)),
            # constant index_map -> weight_map DMA'd once, stays VMEM-resident
            pl.BlockSpec((W, H), lambda b: (0, 0)),
        ],
        out_specs=pl.BlockSpec((batch_block, 1, 2 * NUM_CHANNELS),
                               lambda b: (b, 0, 0)),
        compiler_params=pltpu.CompilerParams(
            dimension_semantics=("parallel",),
            vmem_limit_bytes=vmem_limit),
        cost_estimate=cost,
    )(output_reg, label_reg, weight_map)

    # Stage 2: tiny finalization on 8*B floats -- plain jnp so XLA fuses it.
    return _finalize(sums, log_var, TIME_WEIGHTS[focus_time], B)


# ----------------------------------------------------------------------------
# Pure-JAX reference (mirrors the PyTorch forward), for verification
# ----------------------------------------------------------------------------
def reg_loss_reference(out, lab, wmap, logvar, focus_time="default"):
    tw = TIME_WEIGHTS[focus_time]
    bw = BALANCING_WEIGHTS
    wt = jnp.ones_like(out) * bw[0]
    for i in range(len(bw) - 1):
        thr = (bw[i] + 10.0) / 85.0
        wt = wt + (bw[i + 1] - bw[i]) * (lab >= thr).astype(jnp.float32)
    loss_reg = jnp.zeros((out.shape[0],), jnp.float32)
    for i in range(4):
        cw = wmap[None] if i == 0 else wmap[None] * wt[:, i]
        mse = jnp.sum(cw * (out[:, i] - lab[:, i]) ** 2, axis=(1, 2))
        mae = jnp.sum(cw * jnp.abs(out[:, i] - lab[:, i]), axis=(1, 2))
        comb = MSE_WEIGHT * mse + MAE_WEIGHT * mae
        u = jnp.mean(comb)
        sigma = ((mse + mae - u) > 0.0).astype(jnp.float32)
        loss_reg = loss_reg + tw[i] * sigma * comb
    precision = jnp.exp(-logvar)
    loss = precision * loss_reg + jnp.abs(logvar)
    return jnp.mean(loss)


# ----------------------------------------------------------------------------
if __name__ == "__main__":
    B, C, W, H = 2, 4, 16, 16   # small synthetic shapes (module default: 280x360)

    key = jax.random.PRNGKey(0)
    k1, k2 = jax.random.split(key)
    output_reg = 0.2 * jax.random.normal(k1, (B, C, W, H), dtype=jnp.float32)
    label_reg = jax.random.uniform(k2, (B, C, W, H), dtype=jnp.float32,
                                   minval=0.0, maxval=0.3)

    weight_map = make_weight_map(W, H)
    log_var = jnp.array([[math.log(0.5)]], dtype=jnp.float32)   # log_vars[0]

    loss = reg_loss_pallas(output_reg, label_reg, weight_map, log_var,
                           focus_time="default")
    loss = jax.block_until_ready(loss)

    ref = reg_loss_reference(output_reg, label_reg, weight_map,
                             float(log_var[0, 0]), focus_time="default")
    ref = jax.block_until_ready(ref)

    np.testing.assert_allclose(np.asarray(loss), np.asarray(ref),
                               rtol=1e-4, atol=1e-6)
    print("KERNEL_OK")
</pallas_src>

<mosaic_0001>
module attributes {stable_mosaic.version = 11 : i64} {
  func.func @_channel_sums_kernel(%arg0: i32, %arg1: memref<1x4x16x16xf32, #tpu.memory_space<vmem>>, %arg2: memref<1x4x16x16xf32, #tpu.memory_space<vmem>>, %arg3: memref<16x16xf32, #tpu.memory_space<vmem>>, %arg4: memref<1x1x8xf32, #tpu.memory_space<vmem>>) attributes {dimension_semantics = [#tpu.dimension_semantics<parallel>], iteration_bounds = array<i64: 2>, scalar_prefetch = 0 : i64, scratch_operands = 0 : i64, tpu.core_type = #tpu.core_type<tc>, window_params = [{transform_indices = @transform_0, window_bounds = array<i64: 1, 4, 16, 16>}, {transform_indices = @transform_1, window_bounds = array<i64: 1, 4, 16, 16>}, {pipeline_mode = #tpu.pipeline_mode<synchronous>, transform_indices = @transform_2, window_bounds = array<i64: 16, 16>}, {transform_indices = @transform_3, window_bounds = array<i64: 1, 1, 8>}]} {
    %c0 = arith.constant 0 : index
    %c0_0 = arith.constant 0 : index
    %0 = vector.load %arg3[%c0, %c0_0] : memref<16x16xf32, #tpu.memory_space<vmem>>, vector<16x16xf32>
    %c0_1 = arith.constant 0 : index
    %c0_2 = arith.constant 0 : index
    %c0_3 = arith.constant 0 : index
    %c0_4 = arith.constant 0 : index
    %1 = vector.load %arg1[%c0_1, %c0_2, %c0_3, %c0_4] : memref<1x4x16x16xf32, #tpu.memory_space<vmem>>, vector<1x1x16x16xf32>
    %2 = vector.shape_cast %1 : vector<1x1x16x16xf32> to vector<16x16xf32>
    %c0_5 = arith.constant 0 : index
    %c0_6 = arith.constant 0 : index
    %c0_7 = arith.constant 0 : index
    %c0_8 = arith.constant 0 : index
    %3 = vector.load %arg2[%c0_5, %c0_6, %c0_7, %c0_8] : memref<1x4x16x16xf32, #tpu.memory_space<vmem>>, vector<1x1x16x16xf32>
    %4 = vector.shape_cast %3 : vector<1x1x16x16xf32> to vector<16x16xf32>
    %5 = arith.subf %2, %4 : vector<16x16xf32>
    %6 = math.absf %5 : vector<16x16xf32>
    %7 = arith.mulf %0, %6 : vector<16x16xf32>
    %8 = arith.mulf %7, %6 : vector<16x16xf32>
    %9 = vector.shape_cast %8 : vector<16x16xf32> to vector<1x16x16xf32>
    %cst = arith.constant dense<0.000000e+00> : vector<1xf32>
    %10 = vector.multi_reduction <add>, %9, %cst [1, 2] : vector<1x16x16xf32> to vector<1xf32>
    %11 = vector.shape_cast %10 : vector<1xf32> to vector<1x1x1xf32>
    %12 = vector.extract %11[0, 0, 0] : f32 from vector<1x1x1xf32>
    %13 = vector.broadcast %12 : f32 to vector<1x1xf32>
    %14 = vector.shape_cast %7 : vector<16x16xf32> to vector<1x16x16xf32>
    %cst_9 = arith.constant dense<0.000000e+00> : vector<1xf32>
    %15 = vector.multi_reduction <add>, %14, %cst_9 [1, 2] : vector<1x16x16xf32> to vector<1xf32>
    %16 = vector.shape_cast %15 : vector<1xf32> to vector<1x1x1xf32>
    %17 = vector.extract %16[0, 0, 0] : f32 from vector<1x1x1xf32>
    %18 = vector.broadcast %17 : f32 to vector<1x1xf32>
    %c0_10 = arith.constant 0 : index
    %c1 = arith.constant 1 : index
    %c0_11 = arith.constant 0 : index
    %c0_12 = arith.constant 0 : index
    %19 = vector.load %arg1[%c0_10, %c1, %c0_11, %c0_12] : memref<1x4x16x16xf32, #tpu.memory_space<vmem>>, vector<1x1x16x16xf32>
    %20 = vector.shape_cast %19 : vector<1x1x16x16xf32> to vector<16x16xf32>
    %c0_13 = arith.constant 0 : index
    %c1_14 = arith.constant 1 : index
    %c0_15 = arith.constant 0 : index
    %c0_16 = arith.constant 0 : index
    %21 = vector.load %arg2[%c0_13, %c1_14, %c0_15, %c0_16] : memref<1x4x16x16xf32, #tpu.memory_space<vmem>>, vector<1x1x16x16xf32>
    %22 = vector.shape_cast %21 : vector<1x1x16x16xf32> to vector<16x16xf32>
    %23 = arith.subf %20, %22 : vector<16x16xf32>
    %24 = math.absf %23 : vector<16x16xf32>
    %cst_17 = arith.constant 1.000000e+00 : f32
    %25 = vector.broadcast %cst_17 : f32 to vector<16x16xf32>
    %cst_18 = arith.constant 0.129411772 : f32
    %26 = vector.broadcast %cst_18 : f32 to vector<16x16xf32>
    %27 = arith.cmpf oge, %22, %26 : vector<16x16xf32>
    %cst_19 = arith.constant 1.000000e+00 : f32
    %cst_20 = arith.constant 0.000000e+00 : f32
    %28 = vector.broadcast %cst_19 : f32 to vector<16x16xf32>
    %29 = vector.broadcast %cst_20 : f32 to vector<16x16xf32>
    %30 = arith.select %27, %28, %29 : vector<16x16xi1>, vector<16x16xf32>
    %31 = arith.addf %25, %30 : vector<16x16xf32>
    %cst_21 = arith.constant 0.141176477 : f32
    %32 = vector.broadcast %cst_21 : f32 to vector<16x16xf32>
    %33 = arith.cmpf oge, %22, %32 : vector<16x16xf32>
    %cst_22 = arith.constant 3.000000e+00 : f32
    %cst_23 = arith.constant 0.000000e+00 : f32
    %34 = vector.broadcast %cst_22 : f32 to vector<16x16xf32>
    %35 = vector.broadcast %cst_23 : f32 to vector<16x16xf32>
    %36 = arith.select %33, %34, %35 : vector<16x16xi1>, vector<16x16xf32>
    %37 = arith.addf %31, %36 : vector<16x16xf32>
    %cst_24 = arith.constant 0.176470593 : f32
    %38 = vector.broadcast %cst_24 : f32 to vector<16x16xf32>
    %39 = arith.cmpf oge, %22, %38 : vector<16x16xf32>
    %cst_25 = arith.constant 5.000000e+00 : f32
    %cst_26 = arith.constant 0.000000e+00 : f32
    %40 = vector.broadcast %cst_25 : f32 to vector<16x16xf32>
    %41 = vector.broadcast %cst_26 : f32 to vector<16x16xf32>
    %42 = arith.select %39, %40, %41 : vector<16x16xi1>, vector<16x16xf32>
    %43 = arith.addf %37, %42 : vector<16x16xf32>
    %cst_27 = arith.constant 0.235294119 : f32
    %44 = vector.broadcast %cst_27 : f32 to vector<16x16xf32>
    %45 = arith.cmpf oge, %22, %44 : vector<16x16xf32>
    %cst_28 = arith.constant 3.000000e+01 : f32
    %cst_29 = arith.constant 0.000000e+00 : f32
    %46 = vector.broadcast %cst_28 : f32 to vector<16x16xf32>
    %47 = vector.broadcast %cst_29 : f32 to vector<16x16xf32>
    %48 = arith.select %45, %46, %47 : vector<16x16xi1>, vector<16x16xf32>
    %49 = arith.addf %43, %48 : vector<16x16xf32>
    %50 = arith.mulf %0, %49 : vector<16x16xf32>
    %51 = arith.mulf %50, %24 : vector<16x16xf32>
    %52 = arith.mulf %51, %24 : vector<16x16xf32>
    %53 = vector.shape_cast %52 : vector<16x16xf32> to vector<1x16x16xf32>
    %cst_30 = arith.constant dense<0.000000e+00> : vector<1xf32>
    %54 = vector.multi_reduction <add>, %53, %cst_30 [1, 2] : vector<1x16x16xf32> to vector<1xf32>
    %55 = vector.shape_cast %54 : vector<1xf32> to vector<1x1x1xf32>
    %56 = vector.extract %55[0, 0, 0] : f32 from vector<1x1x1xf32>
    %57 = vector.broadcast %56 : f32 to vector<1x1xf32>
    %58 = vector.shape_cast %51 : vector<16x16xf32> to vector<1x16x16xf32>
    %cst_31 = arith.constant dense<0.000000e+00> : vector<1xf32>
    %59 = vector.multi_reduction <add>, %58, %cst_31 [1, 2] : vector<1x16x16xf32> to vector<1xf32>
    %60 = vector.shape_cast %59 : vector<1xf32> to vector<1x1x1xf32>
    %61 = vector.extract %60[0, 0, 0] : f32 from vector<1x1x1xf32>
    %62 = vector.broadcast %61 : f32 to vector<1x1xf32>
    %c0_32 = arith.constant 0 : index
    %c2 = arith.constant 2 : index
    %c0_33 = arith.constant 0 : index
    %c0_34 = arith.constant 0 : index
    %63 = vector.load %arg1[%c0_32, %c2, %c0_33, %c0_34] : memref<1x4x16x16xf32, #tpu.memory_space<vmem>>, vector<1x1x16x16xf32>
    %64 = vector.shape_cast %63 : vector<1x1x16x16xf32> to vector<16x16xf32>
    %c0_35 = arith.constant 0 : index
    %c2_36 = arith.constant 2 : index
    %c0_37 = arith.constant 0 : index
    %c0_38 = arith.constant 0 : index
    %65 = vector.load %arg2[%c0_35, %c2_36, %c0_37, %c0_38] : memref<1x4x16x16xf32, #tpu.memory_space<vmem>>, vector<1x1x16x16xf32>
    %66 = vector.shape_cast %65 : vector<1x1x16x16xf32> to vector<16x16xf32>
    %67 = arith.subf %64, %66 : vector<16x16xf32>
    %68 = math.absf %67 : vector<16x16xf32>
    %cst_39 = arith.constant 1.000000e+00 : f32
    %69 = vector.broadcast %cst_39 : f32 to vector<16x16xf32>
    %cst_40 = arith.constant 0.129411772 : f32
    %70 = vector.broadcast %cst_40 : f32 to vector<16x16xf32>
    %71 = arith.cmpf oge, %66, %70 : vector<16x16xf32>
    %cst_41 = arith.constant 1.000000e+00 : f32
    %cst_42 = arith.constant 0.000000e+00 : f32
    %72 = vector.broadcast %cst_41 : f32 to vector<16x16xf32>
    %73 = vector.broadcast %cst_42 : f32 to vector<16x16xf32>
    %74 = arith.select %71, %72, %73 : vector<16x16xi1>, vector<16x16xf32>
    %75 = arith.addf %69, %74 : vector<16x16xf32>
    %cst_43 = arith.constant 0.141176477 : f32
    %76 = vector.broadcast %cst_43 : f32 to vector<16x16xf32>
    %77 = arith.cmpf oge, %66, %76 : vector<16x16xf32>
    %cst_44 = arith.constant 3.000000e+00 : f32
    %cst_45 = arith.constant 0.000000e+00 : f32
    %78 = vector.broadcast %cst_44 : f32 to vector<16x16xf32>
    %79 = vector.broadcast %cst_45 : f32 to vector<16x16xf32>
    %80 = arith.select %77, %78, %79 : vector<16x16xi1>, vector<16x16xf32>
    %81 = arith.addf %75, %80 : vector<16x16xf32>
    %cst_46 = arith.constant 0.176470593 : f32
    %82 = vector.broadcast %cst_46 : f32 to vector<16x16xf32>
    %83 = arith.cmpf oge, %66, %82 : vector<16x16xf32>
    %cst_47 = arith.constant 5.000000e+00 : f32
    %cst_48 = arith.constant 0.000000e+00 : f32
    %84 = vector.broadcast %cst_47 : f32 to vector<16x16xf32>
    %85 = vector.broadcast %cst_48 : f32 to vector<16x16xf32>
    %86 = arith.select %83, %84, %85 : vector<16x16xi1>, vector<16x16xf32>
    %87 = arith.addf %81, %86 : vector<16x16xf32>
    %cst_49 = arith.constant 0.235294119 : f32
    %88 = vector.broadcast %cst_49 : f32 to vector<16x16xf32>
    %89 = arith.cmpf oge, %66, %88 : vector<16x16xf32>
    %cst_50 = arith.constant 3.000000e+01 : f32
    %cst_51 = arith.constant 0.000000e+00 : f32
    %90 = vector.broadcast %cst_50 : f32 to vector<16x16xf32>
    %91 = vector.broadcast %cst_51 : f32 to vector<16x16xf32>
    %92 = arith.select %89, %90, %91 : vector<16x16xi1>, vector<16x16xf32>
    %93 = arith.addf %87, %92 : vector<16x16xf32>
    %94 = arith.mulf %0, %93 : vector<16x16xf32>
    %95 = arith.mulf %94, %68 : vector<16x16xf32>
    %96 = arith.mulf %95, %68 : vector<16x16xf32>
    %97 = vector.shape_cast %96 : vector<16x16xf32> to vector<1x16x16xf32>
    %cst_52 = arith.constant dense<0.000000e+00> : vector<1xf32>
    %98 = vector.multi_reduction <add>, %97, %cst_52 [1, 2] : vector<1x16x16xf32> to vector<1xf32>
    %99 = vector.shape_cast %98 : vector<1xf32> to vector<1x1x1xf32>
    %100 = vector.extract %99[0, 0, 0] : f32 from vector<1x1x1xf32>
    %101 = vector.broadcast %100 : f32 to vector<1x1xf32>
    %102 = vector.shape_cast %95 : vector<16x16xf32> to vector<1x16x16xf32>
    %cst_53 = arith.constant dense<0.000000e+00> : vector<1xf32>
    %103 = vector.multi_reduction <add>, %102, %cst_53 [1, 2] : vector<1x16x16xf32> to vector<1xf32>
    %104 = vector.shape_cast %103 : vector<1xf32> to vector<1x1x1xf32>
    %105 = vector.extract %104[0, 0, 0] : f32 from vector<1x1x1xf32>
    %106 = vector.broadcast %105 : f32 to vector<1x1xf32>
    %c0_54 = arith.constant 0 : index
    %c3 = arith.constant 3 : index
    %c0_55 = arith.constant 0 : index
    %c0_56 = arith.constant 0 : index
    %107 = vector.load %arg1[%c0_54, %c3, %c0_55, %c0_56] : memref<1x4x16x16xf32, #tpu.memory_space<vmem>>, vector<1x1x16x16xf32>
    %108 = vector.shape_cast %107 : vector<1x1x16x16xf32> to vector<16x16xf32>
    %c0_57 = arith.constant 0 : index
    %c3_58 = arith.constant 3 : index
    %c0_59 = arith.constant 0 : index
    %c0_60 = arith.constant 0 : index
    %109 = vector.load %arg2[%c0_57, %c3_58, %c0_59, %c0_60] : memref<1x4x16x16xf32, #tpu.memory_space<vmem>>, vector<1x1x16x16xf32>
    %110 = vector.shape_cast %109 : vector<1x1x16x16xf32> to vector<16x16xf32>
    %111 = arith.subf %108, %110 : vector<16x16xf32>
    %112 = math.absf %111 : vector<16x16xf32>
    %cst_61 = arith.constant 1.000000e+00 : f32
    %113 = vector.broadcast %cst_61 : f32 to vector<16x16xf32>
    %cst_62 = arith.constant 0.129411772 : f32
    %114 = vector.broadcast %cst_62 : f32 to vector<16x16xf32>
    %115 = arith.cmpf oge, %110, %114 : vector<16x16xf32>
    %cst_63 = arith.constant 1.000000e+00 : f32
    %cst_64 = arith.constant 0.000000e+00 : f32
    %116 = vector.broadcast %cst_63 : f32 to vector<16x16xf32>
    %117 = vector.broadcast %cst_64 : f32 to vector<16x16xf32>
    %118 = arith.select %115, %116, %117 : vector<16x16xi1>, vector<16x16xf32>
    %119 = arith.addf %113, %118 : vector<16x16xf32>
    %cst_65 = arith.constant 0.141176477 : f32
    %120 = vector.broadcast %cst_65 : f32 to vector<16x16xf32>
    %121 = arith.cmpf oge, %110, %120 : vector<16x16xf32>
    %cst_66 = arith.constant 3.000000e+00 : f32
    %cst_67 = arith.constant 0.000000e+00 : f32
    %122 = vector.broadcast %cst_66 : f32 to vector<16x16xf32>
    %123 = vector.broadcast %cst_67 : f32 to vector<16x16xf32>
    %124 = arith.select %121, %122, %123 : vector<16x16xi1>, vector<16x16xf32>
    %125 = arith.addf %119, %124 : vector<16x16xf32>
    %cst_68 = arith.constant 0.176470593 : f32
    %126 = vector.broadcast %cst_68 : f32 to vector<16x16xf32>
    %127 = arith.cmpf oge, %110, %126 : vector<16x16xf32>
    %cst_69 = arith.constant 5.000000e+00 : f32
    %cst_70 = arith.constant 0.000000e+00 : f32
    %128 = vector.broadcast %cst_69 : f32 to vector<16x16xf32>
    %129 = vector.broadcast %cst_70 : f32 to vector<16x16xf32>
    %130 = arith.select %127, %128, %129 : vector<16x16xi1>, vector<16x16xf32>
    %131 = arith.addf %125, %130 : vector<16x16xf32>
    %cst_71 = arith.constant 0.235294119 : f32
    %132 = vector.broadcast %cst_71 : f32 to vector<16x16xf32>
    %133 = arith.cmpf oge, %110, %132 : vector<16x16xf32>
    %cst_72 = arith.constant 3.000000e+01 : f32
    %cst_73 = arith.constant 0.000000e+00 : f32
    %134 = vector.broadcast %cst_72 : f32 to vector<16x16xf32>
    %135 = vector.broadcast %cst_73 : f32 to vector<16x16xf32>
    %136 = arith.select %133, %134, %135 : vector<16x16xi1>, vector<16x16xf32>
    %137 = arith.addf %131, %136 : vector<16x16xf32>
    %138 = arith.mulf %0, %137 : vector<16x16xf32>
    %139 = arith.mulf %138, %112 : vector<16x16xf32>
    %140 = arith.mulf %139, %112 : vector<16x16xf32>
    %141 = vector.shape_cast %140 : vector<16x16xf32> to vector<1x16x16xf32>
    %cst_74 = arith.constant dense<0.000000e+00> : vector<1xf32>
    %142 = vector.multi_reduction <add>, %141, %cst_74 [1, 2] : vector<1x16x16xf32> to vector<1xf32>
    %143 = vector.shape_cast %142 : vector<1xf32> to vector<1x1x1xf32>
    %144 = vector.extract %143[0, 0, 0] : f32 from vector<1x1x1xf32>
    %145 = vector.broadcast %144 : f32 to vector<1x1xf32>
    %146 = vector.shape_cast %139 : vector<16x16xf32> to vector<1x16x16xf32>
    %cst_75 = arith.constant dense<0.000000e+00> : vector<1xf32>
    %147 = vector.multi_reduction <add>, %146, %cst_75 [1, 2] : vector<1x16x16xf32> to vector<1xf32>
    %148 = vector.shape_cast %147 : vector<1xf32> to vector<1x1x1xf32>
    %149 = vector.extract %148[0, 0, 0] : f32 from vector<1x1x1xf32>
    %150 = vector.broadcast %149 : f32 to vector<1x1xf32>
    %151 = tpu.concatenate %13, %57, %101, %145, %18, %62, %106, %150 in 1 : vector<1x1xf32>, vector<1x1xf32>, vector<1x1xf32>, vector<1x1xf32>, vector<1x1xf32>, vector<1x1xf32>, vector<1x1xf32>, vector<1x1xf32> -> vector<1x8xf32>
    %c0_76 = arith.constant 0 : index
    %c0_77 = arith.constant 0 : index
    %c0_78 = arith.constant 0 : index
    %152 = vector.load %arg4[%c0_76, %c0_77, %c0_78] : memref<1x1x8xf32, #tpu.memory_space<vmem>>, vector<1x1x8xf32>
    %153 = vector.shape_cast %152 : vector<1x1x8xf32> to vector<1x8xf32>
    %154 = vector.shape_cast %151 : vector<1x8xf32> to vector<1x1x8xf32>
    tpu.vector_store %arg4[%c0_76, %c0_77, %c0_78], %154 {strides = array<i32>} : memref<1x1x8xf32, #tpu.memory_space<vmem>>, vector<1x1x8xf32>,
    return
  }
  func.func @transform_0(%arg0: i32) -> (i32, i32, i32, i32) {
    %c0_i32 = arith.constant 0 : i32
    %c0_i32_0 = arith.constant 0 : i32
    %c0_i32_1 = arith.constant 0 : i32
    %c0_i32_2 = arith.constant 0 : i32
    return %arg0, %c0_i32, %c0_i32_0, %c0_i32_1 : i32, i32, i32, i32
  }
  func.func @transform_1(%arg0: i32) -> (i32, i32, i32, i32) {
    %c0_i32 = arith.constant 0 : i32
    %c0_i32_0 = arith.constant 0 : i32
    %c0_i32_1 = arith.constant 0 : i32
    %c0_i32_2 = arith.constant 0 : i32
    return %arg0, %c0_i32, %c0_i32_0, %c0_i32_1 : i32, i32, i32, i32
  }
  func.func @transform_2(%arg0: i32) -> (i32, i32) {
    %c0_i32 = arith.constant 0 : i32
    %c0_i32_0 = arith.constant 0 : i32
    %c0_i32_1 = arith.constant 0 : i32
    return %c0_i32, %c0_i32_0 : i32, i32
  }
  func.func @transform_3(%arg0: i32) -> (i32, i32, i32) {
    %c0_i32 = arith.constant 0 : i32
    %c0_i32_0 = arith.constant 0 : i32
    %c0_i32_1 = arith.constant 0 : i32
    return %arg0, %c0_i32, %c0_i32_0 : i32, i32, i32
  }
}

</mosaic_0001>

<llo_original>
// kernel: tpu_custom_call.1
$region0: #{tpu_custom_call.1}
  #allocation0 [shape = 'u32[]', space=smem, size = 0x4, offset = 0x4, fixed_abs, tag = 'smem constant byte address 0x4 - core index']
  #allocation1 [shape = 'u32[144,128]{1,0:T(1,128)}', space=vmem, size = 0x12000, scoped, tag = 'internal scratch']
  %s0 = inlined_call_operand.hbm [shape: f32[2,4,16,16], index: 0, kind: input, shape index: {}]
  %s1 = inlined_call_operand.hbm [shape: f32[2,4,16,16], index: 1, kind: input, shape index: {}]
  %s2 = inlined_call_operand.hbm [shape: f32[16,16], index: 2, kind: input, shape index: {}]
  %s3 = inlined_call_operand.hbm [shape: f32[2,1,8], index: 3, kind: output, shape index: {}]
  %s4 = sld [smem:[#allocation0]]
  $region57: #{tpu_custom_call.1} parent=0
    _
  %s6 = ssub.s32 1, %s4
  %s7 = scalar_select 0, %s6, %s4
  $region1: #{tpu_custom_call.1} parent=0
    #allocation2 [shape = 'u8[65536]{0}', space=vmem, size = 0x10000, scoped, tag = 'input window, operand 0']
    #allocation3 [shape = 's32[2]{0}', space=sflag, size = 0x8, scoped, tag = 'scoped memory for tpu_custom_call.1']
    #allocation4 [shape = 's32[2]{0}', space=sflag, size = 0x8, scoped, tag = 'scoped memory for tpu_custom_call.1']
    #allocation5 [shape = 'u8[65536]{0}', space=vmem, size = 0x10000, scoped, tag = 'input window, operand 1']
    #allocation6 [shape = 's32[2]{0}', space=sflag, size = 0x8, scoped, tag = 'scoped memory for tpu_custom_call.1']
    #allocation7 [shape = 'u8[8192]{0}', space=vmem, size = 0x2000, scoped, tag = 'input window, operand 2, single buffered']
    #allocation8 [shape = 'u8[1024]{0}', space=vmem, size = 0x400, scoped, tag = 'output window, operand 0']
    %8 = vsyncpa [#allocation3], 0
    %s9 = scalar_lea.sflag [#allocation3], 1
    %10 = vsyncpa %s9, 0
    %11 = vsyncpa [#allocation6], 0
    %s12 = scalar_lea.sflag [#allocation6], 1
    %13 = vsyncpa %s12, 0
    %14 = vsyncpa [#allocation4], 0
    %s15 = scalar_lea.sflag [#allocation4], 1
    %16 = vsyncpa %s15, 0
    loop: start=0, step=1, limit=4
    $region2: #{tpu_custom_call.1} parent=1 // loop_pre_header
      _
    $region3: #{tpu_custom_call.1} parent=1 // loop_header
      %s18 = sphi 0, %s22
      %p19 = scmp.ge.s32.totalorder %s18, 4
      %s28 = sphi 0, %s30
      %s31 = sphi 0, %s28
      %s32 = sphi 0, %s31
      %s48 = sphi 0, %s32
      %s54 = sphi 0, %s56
      %s57 = sphi 0, %s54
      %s58 = sphi 0, %s57
      %s74 = sphi 0, %s58
      %s78 = sphi 0, %s78
      %s80 = sphi 0, %s78
      %s81 = sphi 0, %s80
      %s95 = sphi 0, %s81
      %s101 = sphi 0, %s103
      %s104 = sphi 0, %s101
      %s105 = sphi 0, %s104
      %s121 = sphi 0, %s105
    $region4: #{tpu_custom_call.1} parent=1 // loop_header_branch
      %21 = sbr.rel (%p19) target = $region8
    $region5: #{tpu_custom_call.1} parent=1 // loop_body
      %s23 = ssub.s32 %s18, 1
      %s24 = ssub.s32 %s18, 2
      %s25 = sadd.s32 %s18, 1
      %s26 = ssub.s32 %s18, %s25
      %p27 = scmp.eq.s32.totalorder %s26, 0
      %s29 = sadd.s32 %s28, 1
      %s30 = scalar_select %p27, %s28, %s29
      %p33 = pneg %p27
      %p34 = scmp.eq.s32.totalorder %s18, 1
      %p35 = por %p33, %p34
      %p36 = scmp.ne.s32.totalorder %s28, %s31
      %p37 = scmp.eq.s32.totalorder %s18, 0
      %p38 = por %p36, %p37
      %p39 = scmp.ne.s32.totalorder %s28, %s31
      %p40 = scmp.eq.s32.totalorder %s23, 1
      %p41 = por %p39, %p40
      %p42 = scmp.ne.s32.totalorder %s31, %s32
      %p43 = scmp.eq.s32.totalorder %s23, 0
      %p44 = por %p42, %p43
      %p45 = scmp.ne.s32.totalorder %s31, %s32
      %p46 = scmp.eq.s32.totalorder %s24, 1
      %p47 = por %p45, %p46
      %p49 = scmp.ne.s32.totalorder %s32, %s48
      %p50 = scmp.eq.s32.totalorder %s24, 0
      %p51 = por %p49, %p50
      %s52 = ssub.s32 %s18, %s25
      %p53 = scmp.eq.s32.totalorder %s52, 0
      %s55 = sadd.s32 %s54, 1
      %s56 = scalar_select %p53, %s54, %s55
      %p59 = pneg %p53
      %p60 = scmp.eq.s32.totalorder %s18, 1
      %p61 = por %p59, %p60
      %p62 = scmp.ne.s32.totalorder %s54, %s57
      %p63 = scmp.eq.s32.totalorder %s18, 0
      %p64 = por %p62, %p63
      %p65 = scmp.ne.s32.totalorder %s54, %s57
      %p66 = scmp.eq.s32.totalorder %s23, 1
      %p67 = por %p65, %p66
      %p68 = scmp.ne.s32.totalorder %s57, %s58
      %p69 = scmp.eq.s32.totalorder %s23, 0
      %p70 = por %p68, %p69
      %p71 = scmp.ne.s32.totalorder %s57, %s58
      %p72 = scmp.eq.s32.totalorder %s24, 1
      %p73 = por %p71, %p72
      %p75 = scmp.ne.s32.totalorder %s58, %s74
      %p76 = scmp.eq.s32.totalorder %s24, 0
      %p77 = por %p75, %p76
      %s79 = sadd.s32 %s78, 1
      %p82 = scmp.eq.s32.totalorder %s18, 1
      %p83 = scmp.ne.s32.totalorder %s78, %s80
      %p84 = scmp.eq.s32.totalorder %s18, 0
      %p85 = por %p83, %p84
      %p86 = scmp.ne.s32.totalorder %s78, %s80
      %p87 = scmp.eq.s32.totalorder %s23, 1
      %p88 = por %p86, %p87
      %p89 = scmp.ne.s32.totalorder %s80, %s81
      %p90 = scmp.eq.s32.totalorder %s23, 0
      %p91 = por %p89, %p90
      %p92 = scmp.ne.s32.totalorder %s80, %s81
      %p93 = scmp.eq.s32.totalorder %s24, 1
      %p94 = por %p92, %p93
      %p96 = scmp.ne.s32.totalorder %s81, %s95
      %p97 = scmp.eq.s32.totalorder %s24, 0
      %p98 = por %p96, %p97
      %s99 = ssub.s32 %s18, %s25
      %p100 = scmp.eq.s32.totalorder %s99, 0
      %s102 = sadd.s32 %s101, 1
      %s103 = scalar_select %p100, %s101, %s102
      %p106 = pneg %p100
      %p107 = scmp.eq.s32.totalorder %s18, 1
      %p108 = por %p106, %p107
      %p109 = scmp.ne.s32.totalorder %s101, %s104
      %p110 = scmp.eq.s32.totalorder %s18, 0
      %p111 = por %p109, %p110
      %p112 = scmp.ne.s32.totalorder %s101, %s104
      %p113 = scmp.eq.s32.totalorder %s23, 1
      %p114 = por %p112, %p113
      %p115 = scmp.ne.s32.totalorder %s104, %s105
      %p116 = scmp.eq.s32.totalorder %s23, 0
      %p117 = por %p115, %p116
      %p118 = scmp.ne.s32.totalorder %s104, %s105
      %p119 = scmp.eq.s32.totalorder %s24, 1
      %p120 = por %p118, %p119
      %p122 = scmp.ne.s32.totalorder %s105, %s121
      %p123 = scmp.eq.s32.totalorder %s24, 0
      %p124 = por %p122, %p123
      %p125 = scmp.le.s32.totalorder 1, %s18
      %p126 = scmp.lt.s32.totalorder %s18, 3
      %p127 = pnand %p125, %p126
      %p128 = pneg %p127
      // Predicated region
      $region9: #{tpu_custom_call.1} parent=5 // pred_check
        _
      $region10: #{tpu_custom_call.1} parent=5 // pred_check_branch
        %130 = sbr.rel (%p127) target = $region12
      $region11: #{tpu_custom_call.1} parent=5 // pred_region
        %s131 = ssub.s32 %s18, 1
        // Predicated region
        $region13: #{tpu_custom_call.1} parent=11 // pred_check
          %p132 = pneg %p91
        $region14: #{tpu_custom_call.1} parent=11 // pred_check_branch
          %134 = sbr.rel (%p132) target = $region16
        $region15: #{tpu_custom_call.1} parent=11 // pred_region
          %s136 = ssub.s32 256, 256
          %137 = vsyncadd [#allocation6], %s136
          %s138 = sshll.u32 [#allocation7], 4
          %s139 = int_to_ptr.vmem [resolvable:$true] %s138
          %144 = dma.hbm_to_vmem [thread:$0]  %s2, 256, %s139, [#allocation6], 128, 128, 8
        $region16: #{tpu_custom_call.1} parent=11 // pred_fallthru
          _
      $region12: #{tpu_custom_call.1} parent=5 // pred_fallthru
        _
      %p145 = scmp.lt.s32.totalorder %s18, 2
      // Predicated region
      $region17: #{tpu_custom_call.1} parent=5 // pred_check
        %p146 = pneg %p145
      $region18: #{tpu_custom_call.1} parent=5 // pred_check_branch
        %148 = sbr.rel (%p146) target = $region20
      $region19: #{tpu_custom_call.1} parent=5 // pred_region
        // Predicated region
        $region21: #{tpu_custom_call.1} parent=19 // pred_check
          %p149 = pneg %p38
        $region22: #{tpu_custom_call.1} parent=19 // pred_check_branch
          %151 = sbr.rel (%p149) target = $region24
        $region23: #{tpu_custom_call.1} parent=19 // pred_region
          %s152 = sand.u32 %s28, 1
          %s153 = scalar_lea.sflag [#allocation3], %s152
          %s154 = sand.u32 %s28, 1
          %s155 = smul.addr %s154, 64
          %s156 = scalar_lea.vmem [#allocation2], %s155
          %s158 = ssub.s32 1024, 1024
          %159 = vsyncadd %s153, %s158
          %s160 = smul.addr %s18, 8
          %s161 = smul.addr %s160, 128
          %s162 = scalar_lea.hbm %s0, %s161
          %s163 = sshll.u32 %s156, 4
          %s164 = int_to_ptr.vmem [resolvable:$true] %s163
          %169 = dma.hbm_to_vmem [thread:$0]  %s162, 1024, %s164, %s153, 128, 128, 8
        $region24: #{tpu_custom_call.1} parent=19 // pred_fallthru
          _
        // Predicated region
        $region25: #{tpu_custom_call.1} parent=19 // pred_check
          %p170 = pneg %p64
        $region26: #{tpu_custom_call.1} parent=19 // pred_check_branch
          %172 = sbr.rel (%p170) target = $region28
        $region27: #{tpu_custom_call.1} parent=19 // pred_region
          %s173 = sand.u32 %s18, 1
          %s174 = scalar_lea.sflag [#allocation6], %s173
          %s175 = sand.u32 %s54, 1
          %s176 = smul.addr %s175, 64
          %s177 = scalar_lea.vmem [#allocation5], %s176
          %s179 = ssub.s32 1024, 1024
          %180 = vsyncadd %s174, %s179
          %s181 = smul.addr %s18, 8
          %s182 = smul.addr %s181, 128
          %s183 = scalar_lea.hbm %s1, %s182
          %s184 = sshll.u32 %s177, 4
          %s185 = int_to_ptr.vmem [resolvable:$true] %s184
          %190 = dma.hbm_to_vmem [thread:$0]  %s183, 1024, %s185, %s174, 128, 128, 8
        $region28: #{tpu_custom_call.1} parent=19 // pred_fallthru
          _
      $region20: #{tpu_custom_call.1} parent=5 // pred_fallthru
        _
      %p191 = scmp.le.s32.totalorder 1, %s18
      %p192 = scmp.lt.s32.totalorder %s18, 3
      %p193 = pnand %p191, %p192
      %p194 = pneg %p193
      // Predicated region
      $region29: #{tpu_custom_call.1} parent=5 // pred_check
        _
      $region30: #{tpu_custom_call.1} parent=5 // pred_check_branch
        %196 = sbr.rel (%p193) target = $region32
      $region31: #{tpu_custom_call.1} parent=5 // pred_region
        %s197 = ssub.s32 %s18, 1
        %s198 = sand.u32 %s31, 1
        %s199 = scalar_lea.sflag [#allocation3], %s198
        %s200 = sand.u32 %s31, 1
        %s201 = smul.addr %s200, 64
        %s202 = scalar_lea.vmem [#allocation2], %s201
        // Predicated region
        $region33: #{tpu_custom_call.1} parent=31 // pred_check
          %p203 = pneg %p44
        $region34: #{tpu_custom_call.1} parent=31 // pred_check_branch
          %205 = sbr.rel (%p203) target = $region36
        $region35: #{tpu_custom_call.1} parent=31 // pred_region
          %206 = dma.done %s199, 1024
        $region36: #{tpu_custom_call.1} parent=31 // pred_fallthru
          _
        %s207 = sand.u32 %s23, 1
        %s208 = scalar_lea.sflag [#allocation6], %s207
        %s209 = sand.u32 %s57, 1
        %s210 = smul.addr %s209, 64
        %s211 = scalar_lea.vmem [#allocation5], %s210
        // Predicated region
        $region37: #{tpu_custom_call.1} parent=31 // pred_check
          %p212 = pneg %p70
        $region38: #{tpu_custom_call.1} parent=31 // pred_check_branch
          %214 = sbr.rel (%p212) target = $region40
        $region39: #{tpu_custom_call.1} parent=31 // pred_region
          %215 = dma.done %s208, 1024
        $region40: #{tpu_custom_call.1} parent=31 // pred_fallthru
          _
        // Predicated region
        $region41: #{tpu_custom_call.1} parent=31 // pred_check
          %p216 = pneg %p91
        $region42: #{tpu_custom_call.1} parent=31 // pred_check_branch
          %218 = sbr.rel (%p216) target = $region44
        $region43: #{tpu_custom_call.1} parent=31 // pred_region
          %219 = dma.done [#allocation6], 256
        $region44: #{tpu_custom_call.1} parent=31 // pred_fallthru
          _
        %s220 = sand.u32 %s31, 1
        %s221 = scalar_lea.sflag [#allocation3], %s220
        %s222 = sand.u32 %s31, 1
        %s223 = smul.addr %s222, 64
        %s224 = scalar_lea.vmem [#allocation2], %s223
        %p225 = pneg %p44
        %p226 = pneg %p41
        %s227 = sand.u32 %s23, 1
        %s228 = scalar_lea.sflag [#allocation6], %s227
        %s229 = sand.u32 %s57, 1
        %s230 = smul.addr %s229, 64
        %s231 = scalar_lea.vmem [#allocation5], %s230
        %p232 = pneg %p70
        %p233 = pneg %p67
        %p234 = pneg %p91
        %p235 = pneg %p88
        %p236 = pneg %p117
        %p237 = pneg %p114
        %s238 = sand.u32 %s104, 1
        %s239 = scalar_lea.sflag [#allocation4], %s238
        %s240 = sand.u32 %s104, 1
        %s241 = scalar_lea.vmem [#allocation8], %s240
        %v242 = vld [vmem:[#allocation7] sm:$0xff]
        %v243 = vld [vmem:[#allocation7 + $0x8] sm:$0xff]
        %v244 = vld [vmem:[%s202] sm:$0xff]
        %v245 = vld [vmem:[%s202 + $0x8] sm:$0xff]
        %v246 = vld [vmem:[%s211] sm:$0xff]
        %v247 = vld [vmem:[%s211 + $0x8] sm:$0xff]
        %v248 = vsub.f32 %v244, %v246
        %v249 = vsub.f32 %v245, %v247
        %v250 = vand.u32 2147483647, %v248
        %v251 = vand.u32 2147483647, %v249
        %v252 = vmul.f32 %v242, %v250
        %v253 = vmul.f32 %v243, %v251
        %v254 = vmul.f32 %v252, %v250
        %v255 = vmul.f32 %v253, %v251
        %vm256 = vcmask 130048
        %v257 = vsel %vm256, %v254, 0.0
        %v258 = vsel %vm256, %v255, 0.0
        %v259 = vadd.f32 %v257, %v258
        %260 = vadd.xlane.f32.xlu0 %v259
        %v261 = vpop.xlane.xlu0 %260
        %v262 = vrot.slane %v261, 4
        %v263 = vadd.f32 %v261, %v262
        %v264 = vrot.slane %v263, 2
        %v265 = vadd.f32 %v263, %v264
        %v266 = vrot.slane %v265, 1
        %v267 = vadd.f32 %v265, %v266
        %s268 = vtos %v267
        %v269 = vstv %s268
        %v270 = vsel %vm256, %v252, 0.0
        %v271 = vsel %vm256, %v253, 0.0
        %v272 = vadd.f32 %v270, %v271
        %273 = vadd.xlane.f32.xlu0 %v272
        %v274 = vpop.xlane.xlu0 %273
        %v275 = vrot.slane %v274, 4
        %v276 = vadd.f32 %v274, %v275
        %v277 = vrot.slane %v276, 2
        %v278 = vadd.f32 %v276, %v277
        %v279 = vrot.slane %v278, 1
        %v280 = vadd.f32 %v278, %v279
        %s281 = vtos %v280
        %v282 = vstv %s281
        %s283 = scalar_lea.vmem %s202, 16 [#allocation2]
        %v284 = vld [vmem:[%s283] sm:$0xff]
        %v285 = vld [vmem:[%s283 + $0x8] sm:$0xff]
        %s286 = scalar_lea.vmem %s211, 16 [#allocation5]
        %v287 = vld [vmem:[%s286] sm:$0xff]
        %v288 = vld [vmem:[%s286 + $0x8] sm:$0xff]
        %v289 = vsub.f32 %v284, %v287
        %v290 = vsub.f32 %v285, %v288
        %v291 = vand.u32 2147483647, %v289
        %v292 = vand.u32 2147483647, %v290
        %vm293 = vcmp.ge.f32.partialorder %v287, 0.12941177
        %vm294 = vcmp.ge.f32.partialorder %v288, 0.12941177
        %v295 = vsel %vm293, 1.0, 0.0
        %v296 = vsel %vm294, 1.0, 0.0
        %v297 = vadd.f32 %v295, 1.0
        %v298 = vadd.f32 %v296, 1.0
        %vm299 = vcmp.ge.f32.partialorder %v287, 0.14117648
        %vm300 = vcmp.ge.f32.partialorder %v288, 0.14117648
        %v301 = vsel %vm299, 3.0, 0.0
        %v302 = vsel %vm300, 3.0, 0.0
        %v303 = vadd.f32 %v297, %v301
        %v304 = vadd.f32 %v298, %v302
        %vm305 = vcmp.ge.f32.partialorder %v287, 0.1764706
        %vm306 = vcmp.ge.f32.partialorder %v288, 0.1764706
        %v307 = vsel %vm305, 5.0, 0.0
        %v308 = vsel %vm306, 5.0, 0.0
        %v309 = vadd.f32 %v303, %v307
        %v310 = vadd.f32 %v304, %v308
        %vm311 = vcmp.ge.f32.partialorder %v287, 0.23529412
        %vm312 = vcmp.ge.f32.partialorder %v288, 0.23529412
        %v313 = vsel %vm311, 30.0, 0.0
        %v314 = vsel %vm312, 30.0, 0.0
        %v315 = vadd.f32 %v309, %v313
        %v316 = vadd.f32 %v310, %v314
        %v317 = vmul.f32 %v242, %v315
        %v318 = vmul.f32 %v243, %v316
        %v319 = vmul.f32 %v317, %v291
        %v320 = vmul.f32 %v318, %v292
        %v321 = vmul.f32 %v319, %v291
        %v322 = vmul.f32 %v320, %v292
        %v323 = vsel %vm256, %v321, 0.0
        %v324 = vsel %vm256, %v322, 0.0
        %v325 = vadd.f32 %v323, %v324
        %326 = vadd.xlane.f32.xlu0 %v325
        %v327 = vpop.xlane.xlu0 %326
        %v328 = vrot.slane %v327, 4
        %v329 = vadd.f32 %v327, %v328
        %v330 = vrot.slane %v329, 2
        %v331 = vadd.f32 %v329, %v330
        %v332 = vrot.slane %v331, 1
        %v333 = vadd.f32 %v331, %v332
        %s334 = vtos %v333
        %v335 = vstv %s334
        %v336 = vsel %vm256, %v319, 0.0
        %v337 = vsel %vm256, %v320, 0.0
        %v338 = vadd.f32 %v336, %v337
        %339 = vadd.xlane.f32.xlu0 %v338
        %v340 = vpop.xlane.xlu0 %339
        %v341 = vrot.slane %v340, 4
        %v342 = vadd.f32 %v340, %v341
        %v343 = vrot.slane %v342, 2
        %v344 = vadd.f32 %v342, %v343
        %v345 = vrot.slane %v344, 1
        %v346 = vadd.f32 %v344, %v345
        %s347 = vtos %v346
        %v348 = vstv %s347
        %s349 = scalar_lea.vmem %s202, 32 [#allocation2]
        %v350 = vld [vmem:[%s349] sm:$0xff]
        %v351 = vld [vmem:[%s349 + $0x8] sm:$0xff]
        %s352 = scalar_lea.vmem %s211, 32 [#allocation5]
        %v353 = vld [vmem:[%s352] sm:$0xff]
        %v354 = vld [vmem:[%s352 + $0x8] sm:$0xff]
        %v355 = vsub.f32 %v350, %v353
        %v356 = vsub.f32 %v351, %v354
        %v357 = vand.u32 2147483647, %v355
        %v358 = vand.u32 2147483647, %v356
        %vm359 = vcmp.ge.f32.partialorder %v353, 0.12941177
        %vm360 = vcmp.ge.f32.partialorder %v354, 0.12941177
        %v361 = vsel %vm359, 1.0, 0.0
        %v362 = vsel %vm360, 1.0, 0.0
        %v363 = vadd.f32 %v361, 1.0
        %v364 = vadd.f32 %v362, 1.0
        %vm365 = vcmp.ge.f32.partialorder %v353, 0.14117648
        %vm366 = vcmp.ge.f32.partialorder %v354, 0.14117648
        %v367 = vsel %vm365, 3.0, 0.0
        %v368 = vsel %vm366, 3.0, 0.0
        %v369 = vadd.f32 %v363, %v367
        %v370 = vadd.f32 %v364, %v368
        %vm371 = vcmp.ge.f32.partialorder %v353, 0.1764706
        %vm372 = vcmp.ge.f32.partialorder %v354, 0.1764706
        %v373 = vsel %vm371, 5.0, 0.0
        %v374 = vsel %vm372, 5.0, 0.0
        %v375 = vadd.f32 %v369, %v373
        %v376 = vadd.f32 %v370, %v374
        %vm377 = vcmp.ge.f32.partialorder %v353, 0.23529412
        %vm378 = vcmp.ge.f32.partialorder %v354, 0.23529412
        %v379 = vsel %vm377, 30.0, 0.0
        %v380 = vsel %vm378, 30.0, 0.0
        %v381 = vadd.f32 %v375, %v379
        %v382 = vadd.f32 %v376, %v380
        %v383 = vmul.f32 %v242, %v381
        %v384 = vmul.f32 %v243, %v382
        %v385 = vmul.f32 %v383, %v357
        %v386 = vmul.f32 %v384, %v358
        %v387 = vmul.f32 %v385, %v357
        %v388 = vmul.f32 %v386, %v358
        %v389 = vsel %vm256, %v387, 0.0
        %v390 = vsel %vm256, %v388, 0.0
        %v391 = vadd.f32 %v389, %v390
        %392 = vadd.xlane.f32.xlu0 %v391
        %v393 = vpop.xlane.xlu0 %392
        %v394 = vrot.slane %v393, 4
        %v395 = vadd.f32 %v393, %v394
        %v396 = vrot.slane %v395, 2
        %v397 = vadd.f32 %v395, %v396
        %v398 = vrot.slane %v397, 1
        %v399 = vadd.f32 %v397, %v398
        %s400 = vtos %v399
        %v401 = vstv %s400
        %v402 = vsel %vm256, %v385, 0.0
        %v403 = vsel %vm256, %v386, 0.0
        %v404 = vadd.f32 %v402, %v403
        %405 = vadd.xlane.f32.xlu0 %v404
        %v406 = vpop.xlane.xlu0 %405
        %v407 = vrot.slane %v406, 4
        %v408 = vadd.f32 %v406, %v407
        %v409 = vrot.slane %v408, 2
        %v410 = vadd.f32 %v408, %v409
        %v411 = vrot.slane %v410, 1
        %v412 = vadd.f32 %v410, %v411
        %s413 = vtos %v412
        %v414 = vstv %s413
        %s415 = scalar_lea.vmem %s202, 48 [#allocation2]
        %v416 = vld [vmem:[%s415] sm:$0xff]
        %v417 = vld [vmem:[%s415 + $0x8] sm:$0xff]
        %s418 = scalar_lea.vmem %s211, 48 [#allocation5]
        %v419 = vld [vmem:[%s418] sm:$0xff]
        %v420 = vld [vmem:[%s418 + $0x8] sm:$0xff]
        %v421 = vsub.f32 %v416, %v419
        %v422 = vsub.f32 %v417, %v420
        %v423 = vand.u32 2147483647, %v421
        %v424 = vand.u32 2147483647, %v422
        %vm425 = vcmp.ge.f32.partialorder %v419, 0.12941177
        %vm426 = vcmp.ge.f32.partialorder %v420, 0.12941177
        %v427 = vsel %vm425, 1.0, 0.0
        %v428 = vsel %vm426, 1.0, 0.0
        %v429 = vadd.f32 %v427, 1.0
        %v430 = vadd.f32 %v428, 1.0
        %vm431 = vcmp.ge.f32.partialorder %v419, 0.14117648
        %vm432 = vcmp.ge.f32.partialorder %v420, 0.14117648
        %v433 = vsel %vm431, 3.0, 0.0
        %v434 = vsel %vm432, 3.0, 0.0
        %v435 = vadd.f32 %v429, %v433
        %v436 = vadd.f32 %v430, %v434
        %vm437 = vcmp.ge.f32.partialorder %v419, 0.1764706
        %vm438 = vcmp.ge.f32.partialorder %v420, 0.1764706
        %v439 = vsel %vm437, 5.0, 0.0
        %v440 = vsel %vm438, 5.0, 0.0
        %v441 = vadd.f32 %v435, %v439
        %v442 = vadd.f32 %v436, %v440
        %vm443 = vcmp.ge.f32.partialorder %v419, 0.23529412
        %vm444 = vcmp.ge.f32.partialorder %v420, 0.23529412
        %v445 = vsel %vm443, 30.0, 0.0
        %v446 = vsel %vm444, 30.0, 0.0
        %v447 = vadd.f32 %v441, %v445
        %v448 = vadd.f32 %v442, %v446
        %v449 = vmul.f32 %v242, %v447
        %v450 = vmul.f32 %v243, %v448
        %v451 = vmul.f32 %v449, %v423
        %v452 = vmul.f32 %v450, %v424
        %v453 = vmul.f32 %v451, %v423
        %v454 = vmul.f32 %v452, %v424
        %v455 = vsel %vm256, %v453, 0.0
        %v456 = vsel %vm256, %v454, 0.0
        %v457 = vadd.f32 %v455, %v456
        %458 = vadd.xlane.f32.xlu0 %v457
        %v459 = vpop.xlane.xlu0 %458
        %v460 = vrot.slane %v459, 4
        %v461 = vadd.f32 %v459, %v460
        %v462 = vrot.slane %v461, 2
        %v463 = vadd.f32 %v461, %v462
        %v464 = vrot.slane %v463, 1
        %v465 = vadd.f32 %v463, %v464
        %s466 = vtos %v465
        %v467 = vstv %s466
        %v468 = vsel %vm256, %v451, 0.0
        %v469 = vsel %vm256, %v452, 0.0
        %v470 = vadd.f32 %v468, %v469
        %471 = vadd.xlane.f32.xlu0 %v470
        %v472 = vpop.xlane.xlu0 %471
        %v473 = vrot.slane %v472, 4
        %v474 = vadd.f32 %v472, %v473
        %v475 = vrot.slane %v474, 2
        %v476 = vadd.f32 %v474, %v475
        %v477 = vrot.slane %v476, 1
        %v478 = vadd.f32 %v476, %v477
        %s479 = vtos %v478
        %v480 = vstv %s479
        %vm481 = vcmask 7168
        %v482 = vsel %vm481, %v269, %v335
        %vm483 = vcmask 15360
        %v484 = vsel %vm483, %v482, %v401
        %vm485 = vcmask 23552
        %v486 = vsel %vm485, %v484, %v467
        %vm487 = vcmask 31744
        %v488 = vsel %vm487, %v486, %v282
        %vm489 = vcmask 39936
        %v490 = vsel %vm489, %v488, %v348
        %vm491 = vcmask 48128
        %v492 = vsel %vm491, %v490, %v414
        %vm493 = vcmask 56320
        %v494 = vsel %vm493, %v492, %v480
        %vm495 = vcmask 57344
        %496 = vst.msk [vmem:[%s241] sm:$0x1] %vm495, %v494
        %s497 = sand.u32 %s104, 1
        %s498 = scalar_lea.sflag [#allocation4], %s497
        %s499 = sand.u32 %s104, 1
        %s500 = scalar_lea.vmem [#allocation8], %s499
        // Predicated region
        $region45: #{tpu_custom_call.1} parent=31 // pred_check
          %p501 = pneg %p114
        $region46: #{tpu_custom_call.1} parent=31 // pred_check_branch
          %503 = sbr.rel (%p501) target = $region48
        $region47: #{tpu_custom_call.1} parent=31 // pred_region
          %s505 = ssub.s32 16, 16
          %506 = vsyncadd %s498, %s505
          %s507 = smul.addr %s23, 16
          %s508 = scalar_lea.hbm %s3, %s507
          %s510 = sshll.u32 %s500, 4
          %s511 = int_to_ptr.vmem [resolvable:$true] %s510
          %513 = dma.vmem_to_hbm [thread:$0]  %s511, 16, %s508, %s498
        $region48: #{tpu_custom_call.1} parent=31 // pred_fallthru
          _
      $region32: #{tpu_custom_call.1} parent=5 // pred_fallthru
        _
      %p514 = scmp.le.s32.totalorder 2, %s18
      // Predicated region
      $region49: #{tpu_custom_call.1} parent=5 // pred_check
        %p515 = pneg %p514
      $region50: #{tpu_custom_call.1} parent=5 // pred_check_branch
        %517 = sbr.rel (%p515) target = $region52
      $region51: #{tpu_custom_call.1} parent=5 // pred_region
        %s518 = ssub.s32 %s18, 2
        // Predicated region
        $region53: #{tpu_custom_call.1} parent=51 // pred_check
          %p519 = pneg %p120
        $region54: #{tpu_custom_call.1} parent=51 // pred_check_branch
          %521 = sbr.rel (%p519) target = $region56
        $region55: #{tpu_custom_call.1} parent=51 // pred_region
          %s522 = sand.u32 %s105, 1
          %s523 = scalar_lea.sflag [#allocation4], %s522
          %s524 = sand.u32 %s105, 1
          %s525 = scalar_lea.vmem [#allocation8], %s524
          %526 = dma.done %s523, 16
        $region56: #{tpu_custom_call.1} parent=51 // pred_fallthru
          _
      $region52: #{tpu_custom_call.1} parent=5 // pred_fallthru
        _
    $region6: #{tpu_custom_call.1} parent=1 // loop_footer
      %s22 = sadd.s32 1, %s18
    $region7: #{tpu_custom_call.1} parent=1 // loop_footer_branch
      %17 = sbr.rel target = $region3
    $region8: #{tpu_custom_call.1} parent=1 // loop_exit
      _
    %527 = vsyncpa [#allocation3], 1
    %s528 = scalar_lea.sflag [#allocation3], 1
    %529 = vsyncpa %s528, 1
    %530 = vsyncpa [#allocation6], 1
    %s531 = scalar_lea.sflag [#allocation6], 1
    %532 = vsyncpa %s531, 1
    %533 = vsyncpa [#allocation4], 1
    %s534 = scalar_lea.sflag [#allocation4], 1
    %535 = vsyncpa %s534, 1

</llo_original>
